<compile_context>
chip_gen: v5e
topology: v5e:2x2
jax: 0.10.0
libtpu: 0.0.40
codegen_flags: <defaults>
</compile_context>

<pallas_src>
import jax
import jax.numpy as jnp
from jax import lax
from jax.experimental import pallas as pl
from jax.experimental.pallas import tpu as pltpu

_EPS = 1e-5


def _mass_centre_heads_kernel(
    feat_ref,   # (B, L)      flattened encoder features (f32)
    w1a_ref,    # (L+1, 2H)   rows 0:L  : both heads' Linear(L,H) weights with
                #             BN1 gamma folded, concatenated (x head | y head)
                #             row  L    : folded Linear1 bias (beta1 @ W1 + b1)
    w2e_ref,    # (2H+1, 2)   rows 0:2H : block-diagonal folded final weights
                #             (col 0 = x head, col 1 = y head)
                #             row  2H   : folded final bias per head
    out_ref,    # (B, 2)      col 0 = x head, col 1 = y head (PyTorch layout)
):
    L = w1a_ref.shape[0] - 1
    H2 = w2e_ref.shape[0] - 1

    # Features are already f32; if the encoder ever emits bf16, upcast here.
    f = feat_ref[...]

    # Shared BatchNorm1d(L) statistics (training mode, biased variance).
    # Head-invariant -> computed once; affine already folded into w1a.
    mu = jnp.mean(f, axis=0, keepdims=True)
    c = f - mu
    var = jnp.mean(c * c, axis=0, keepdims=True)
    fn = c * lax.rsqrt(var + _EPS)

    # Both heads' Linear(L,H) as ONE (L, 2H) MXU matmul; bias is the last row
    # of the same operand (static ref slices are free).
    h = jnp.dot(fn, w1a_ref[0:L, :], preferred_element_type=jnp.float32)
    h = h + w1a_ref[L:L + 1, :]

    # BatchNorm1d(H) stats are per-column, so the concatenated (B, 2H) pass is
    # exactly the per-head computation done once; affine folded into w2e.
    mu2 = jnp.mean(h, axis=0, keepdims=True)
    c2 = h - mu2
    var2 = jnp.mean(c2 * c2, axis=0, keepdims=True)
    hn = c2 * lax.rsqrt(var2 + _EPS)

    # Final Linear(H,1) for both heads: native-orientation MXU matmul against
    # the (2H, 2) block-diagonal weight -> (B, 2) directly (no transpose),
    # then the folded bias row.
    out = jnp.dot(hn, w2e_ref[0:H2, :], preferred_element_type=jnp.float32)
    out = out + w2e_ref[H2:H2 + 1, :]
    out_ref[...] = out.astype(out_ref.dtype)


def fold_head_params(p):
    """One-time algebraic fold of the BN affines into the Linear weights.

    Hoisted out of the per-forward jit path: for static head weights this runs
    ONCE and its outputs are reused by every forward, so the jitted forward
    contains only the encoder and the single Pallas call.
    """
    H = p["w1"].shape[-1]

    # BN1 affine into Linear(L,H):  (z*g1 + be1) @ W1 + b1
    #                            == z @ (g1[:,None]*W1) + (be1 @ W1 + b1)
    w1c = jnp.concatenate(
        [p["bn1_g"][0][:, None] * p["w1"][0],
         p["bn1_g"][1][:, None] * p["w1"][1]], axis=1)                  # (L, 2H)
    b1c = jnp.concatenate(
        [p["bn1_b"][0] @ p["w1"][0] + p["b1"][0],
         p["bn1_b"][1] @ p["w1"][1] + p["b1"][1]])                      # (2H,)
    w1a = jnp.concatenate([w1c, b1c[None, :]], axis=0)                  # (L+1, 2H)

    # BN2 affine into Linear(H,1): sum((z*g2+be2)*w2)+b2
    #                           == sum(z*(g2*w2)) + (sum(be2*w2)+b2)
    w2x = p["bn2_g"][0] * p["w2"][0]                                    # (H,)
    w2y = p["bn2_g"][1] * p["w2"][1]
    zeros_h = jnp.zeros((H,), jnp.float32)
    w2_bd = jnp.stack([jnp.concatenate([w2x, zeros_h]),
                       jnp.concatenate([zeros_h, w2y])], axis=1)        # (2H, 2)
    b2c = jnp.stack(
        [jnp.sum(p["bn2_b"][0] * p["w2"][0]) + p["b2"][0, 0],
         jnp.sum(p["bn2_b"][1] * p["w2"][1]) + p["b2"][1, 0]])          # (2,)
    w2e = jnp.concatenate([w2_bd, b2c[None, :]], axis=0)                # (2H+1, 2)

    return {"w1a": w1a.astype(jnp.float32), "w2e": w2e.astype(jnp.float32)}


def mass_centre_heads(features, folded):
    """features: (B, L) f32, folded: fold_head_params output -> (B, 2) f32."""
    B, L = features.shape
    H2 = folded["w2e"].shape[0] - 1          # = 2 * hidden_layer_size

    vmem = pl.BlockSpec(memory_space=pltpu.MemorySpace.VMEM)
    cost = pl.CostEstimate(
        flops=int(2 * B * L * H2 + 2 * B * H2 * 2 + 12 * B * (L + H2)),
        transcendentals=int(L + H2),
        bytes_accessed=int(4 * (B * L + (L + 1) * H2 + (H2 + 1) * 2 + B * 2)),
    )
    return pl.pallas_call(
        _mass_centre_heads_kernel,
        out_shape=jax.ShapeDtypeStruct((B, 2), jnp.float32),
        in_specs=[vmem, vmem, vmem],
        out_specs=vmem,
        cost_estimate=cost,
    )(features, folded["w1a"], folded["w2e"])


# ---- glue: synthetic stand-in for the external `encoder` argument ----------
# TODO(synk): the real encoder is an arbitrary external nn.Module passed to
# forward(); it is modeled here by a single NCHW conv executed in plain XLA.
def synthetic_encoder(x, conv_w, conv_b):
    y = lax.conv_general_dilated(
        x, conv_w, window_strides=(2, 2), padding=((1, 1), (1, 1)),
        dimension_numbers=("NCHW", "OIHW", "NCHW"))
    y = y + conv_b[None, :, None, None]
    return (y,)                                   # encoder(x) returns a tuple


def super_entity_mass_centre_forward(input_features, encoder_params, folded_head_params):
    features = synthetic_encoder(input_features, *encoder_params)[0]   # encoder(x)[0]
    features = features.reshape(features.shape[0], -1)                 # nn.Flatten()
    return mass_centre_heads(features, folded_head_params)             # heads + concat


# ---- pure-JAX reference (unfused, unfolded params) --------------------------
def _heads_ref(f, p):
    cols = []
    for head in range(2):
        mu = jnp.mean(f, axis=0, keepdims=True)
        var = jnp.mean((f - mu) ** 2, axis=0, keepdims=True)
        fn = (f - mu) / jnp.sqrt(var + _EPS)
        fn = fn * p["bn1_g"][head] + p["bn1_b"][head]
        h = fn @ p["w1"][head] + p["b1"][head]
        mu2 = jnp.mean(h, axis=0, keepdims=True)
        var2 = jnp.mean((h - mu2) ** 2, axis=0, keepdims=True)
        hn = (h - mu2) / jnp.sqrt(var2 + _EPS)
        hn = hn * p["bn2_g"][head] + p["bn2_b"][head]
        col = jnp.sum(hn * p["w2"][head], axis=1, keepdims=True) + p["b2"][head]
        cols.append(col)
    return jnp.concatenate(cols, axis=1)


if __name__ == "__main__":
    B, H_img, W_img = 2, 16, 16
    C_enc = 4
    latent_space_size = C_enc * (H_img // 2) * (W_img // 2)   # 256
    hidden_layer_size = 32

    key = jax.random.PRNGKey(0)
    ks = jax.random.split(key, 8)

    # Deterministic synthetic parameters (non-trivial BN1 affine to exercise
    # the weight folds).
    conv_w = 0.05 * jax.random.normal(ks[0], (C_enc, 1, 3, 3), jnp.float32)
    conv_b = jnp.zeros((C_enc,), jnp.float32)
    head_params = {
        "bn1_g": 1.0 + 0.1 * jax.random.normal(ks[6], (2, latent_space_size), jnp.float32),
        "bn1_b": 0.05 * jax.random.normal(ks[7], (2, latent_space_size), jnp.float32),
        "w1": 0.05 * jax.random.normal(ks[1], (2, latent_space_size, hidden_layer_size), jnp.float32),
        "b1": 0.01 * jax.random.normal(ks[2], (2, hidden_layer_size), jnp.float32),
        "bn2_g": jnp.ones((2, hidden_layer_size), jnp.float32),
        "bn2_b": jnp.zeros((2, hidden_layer_size), jnp.float32),
        "w2": 0.1 * jax.random.normal(ks[3], (2, hidden_layer_size), jnp.float32),
        "b2": 0.01 * jax.random.normal(ks[4], (2, 1), jnp.float32),
    }

    # One-time fold of BN affines into the Linear weights (hoisted out of the
    # per-call jit path; reused by every forward).
    folded_head_params = jax.tree_util.tree_map(
        jax.block_until_ready, fold_head_params(head_params))

    # Example input: batch of 2 super-entity masks, NCHW with channel=1
    # (get_input_features adds the channel dim).
    input_features = jax.random.uniform(ks[5], (B, 1, H_img, W_img), jnp.float32)

    fwd = jax.jit(super_entity_mass_centre_forward)
    out = fwd(input_features, (conv_w, conv_b), folded_head_params)
    out = jax.block_until_ready(out)
    assert out.shape == (B, 2) and out.dtype == jnp.float32

    # Sanity check against the pure-JAX (unfolded) reference.
    feats = synthetic_encoder(input_features, conv_w, conv_b)[0].reshape(B, -1)
    ref = _heads_ref(feats, head_params)
    assert jnp.allclose(out, ref, atol=2e-3, rtol=2e-3), (out, ref)

    print("KERNEL_OK")
</pallas_src>

<mosaic_0001>
module attributes {stable_mosaic.version = 11 : i64} {
  func.func @_mass_centre_heads_kernel(%arg0: memref<2x256xf32, #tpu.memory_space<vmem>>, %arg1: memref<257x64xf32, #tpu.memory_space<vmem>>, %arg2: memref<65x2xf32, #tpu.memory_space<vmem>>, %arg3: memref<2x2xf32, #tpu.memory_space<vmem>>) attributes {dimension_semantics = [], scalar_prefetch = 0 : i64, scratch_operands = 0 : i64, tpu.core_type = #tpu.core_type<tc>} {
    %c0 = arith.constant 0 : index
    %c0_0 = arith.constant 0 : index
    %0 = vector.load %arg0[%c0, %c0_0] : memref<2x256xf32, #tpu.memory_space<vmem>>, vector<2x256xf32>
    %cst = arith.constant dense<0.000000e+00> : vector<256xf32>
    %1 = vector.multi_reduction <add>, %0, %cst [0] : vector<2x256xf32> to vector<256xf32>
    %2 = vector.shape_cast %1 : vector<256xf32> to vector<1x256xf32>
    %cst_1 = arith.constant 2.000000e+00 : f32
    %3 = vector.broadcast %cst_1 : f32 to vector<1x256xf32>
    %4 = arith.divf %2, %3 : vector<1x256xf32>
    %5 = vector.broadcast %4 : vector<1x256xf32> to vector<2x256xf32>
    %6 = arith.subf %0, %5 : vector<2x256xf32>
    %7 = arith.mulf %6, %6 : vector<2x256xf32>
    %cst_2 = arith.constant dense<0.000000e+00> : vector<256xf32>
    %8 = vector.multi_reduction <add>, %7, %cst_2 [0] : vector<2x256xf32> to vector<256xf32>
    %9 = vector.shape_cast %8 : vector<256xf32> to vector<1x256xf32>
    %cst_3 = arith.constant 2.000000e+00 : f32
    %10 = vector.broadcast %cst_3 : f32 to vector<1x256xf32>
    %11 = arith.divf %9, %10 : vector<1x256xf32>
    %cst_4 = arith.constant 9.99999974E-6 : f32
    %12 = vector.broadcast %cst_4 : f32 to vector<1x256xf32>
    %13 = arith.addf %11, %12 : vector<1x256xf32>
    %14 = math.rsqrt %13 : vector<1x256xf32>
    %15 = vector.broadcast %14 : vector<1x256xf32> to vector<2x256xf32>
    %16 = arith.mulf %6, %15 : vector<2x256xf32>
    %c0_5 = arith.constant 0 : index
    %c0_6 = arith.constant 0 : index
    %17 = vector.load %arg1[%c0_5, %c0_6] : memref<257x64xf32, #tpu.memory_space<vmem>>, vector<256x64xf32>
    %cst_7 = arith.constant dense<0.000000e+00> : vector<2x64xf32>
    %18 = tpu.matmul %16, %17, %cst_7 {dimension_numbers = #tpu.dot_dimension_numbers<[1], [0], [0], [1], [0, 0, 1, 1], [], []>} : vector<2x256xf32>, vector<256x64xf32>, vector<2x64xf32> -> vector<2x64xf32>
    %c256 = arith.constant 256 : index
    %c0_8 = arith.constant 0 : index
    %19 = vector.load %arg1[%c256, %c0_8] : memref<257x64xf32, #tpu.memory_space<vmem>>, vector<1x64xf32>
    %20 = vector.broadcast %19 : vector<1x64xf32> to vector<2x64xf32>
    %21 = arith.addf %18, %20 : vector<2x64xf32>
    %cst_9 = arith.constant dense<0.000000e+00> : vector<64xf32>
    %22 = vector.multi_reduction <add>, %21, %cst_9 [0] : vector<2x64xf32> to vector<64xf32>
    %23 = vector.shape_cast %22 : vector<64xf32> to vector<1x64xf32>
    %cst_10 = arith.constant 2.000000e+00 : f32
    %24 = vector.broadcast %cst_10 : f32 to vector<1x64xf32>
    %25 = arith.divf %23, %24 : vector<1x64xf32>
    %26 = vector.broadcast %25 : vector<1x64xf32> to vector<2x64xf32>
    %27 = arith.subf %21, %26 : vector<2x64xf32>
    %28 = arith.mulf %27, %27 : vector<2x64xf32>
    %cst_11 = arith.constant dense<0.000000e+00> : vector<64xf32>
    %29 = vector.multi_reduction <add>, %28, %cst_11 [0] : vector<2x64xf32> to vector<64xf32>
    %30 = vector.shape_cast %29 : vector<64xf32> to vector<1x64xf32>
    %cst_12 = arith.constant 2.000000e+00 : f32
    %31 = vector.broadcast %cst_12 : f32 to vector<1x64xf32>
    %32 = arith.divf %30, %31 : vector<1x64xf32>
    %cst_13 = arith.constant 9.99999974E-6 : f32
    %33 = vector.broadcast %cst_13 : f32 to vector<1x64xf32>
    %34 = arith.addf %32, %33 : vector<1x64xf32>
    %35 = math.rsqrt %34 : vector<1x64xf32>
    %36 = vector.broadcast %35 : vector<1x64xf32> to vector<2x64xf32>
    %37 = arith.mulf %27, %36 : vector<2x64xf32>
    %c0_14 = arith.constant 0 : index
    %c0_15 = arith.constant 0 : index
    %38 = vector.load %arg2[%c0_14, %c0_15] : memref<65x2xf32, #tpu.memory_space<vmem>>, vector<64x2xf32>
    %cst_16 = arith.constant dense<0.000000e+00> : vector<2x2xf32>
    %39 = tpu.matmul %37, %38, %cst_16 {dimension_numbers = #tpu.dot_dimension_numbers<[1], [0], [0], [1], [0, 0, 1, 1], [], []>} : vector<2x64xf32>, vector<64x2xf32>, vector<2x2xf32> -> vector<2x2xf32>
    %c64 = arith.constant 64 : index
    %c0_17 = arith.constant 0 : index
    %40 = vector.load %arg2[%c64, %c0_17] : memref<65x2xf32, #tpu.memory_space<vmem>>, vector<1x2xf32>
    %41 = vector.broadcast %40 : vector<1x2xf32> to vector<2x2xf32>
    %42 = arith.addf %39, %41 : vector<2x2xf32>
    %c0_18 = arith.constant 0 : index
    %c0_19 = arith.constant 0 : index
    %43 = vector.load %arg3[%c0_18, %c0_19] : memref<2x2xf32, #tpu.memory_space<vmem>>, vector<2x2xf32>
    tpu.vector_store %arg3[%c0_18, %c0_19], %42 {strides = array<i32>} : memref<2x2xf32, #tpu.memory_space<vmem>>, vector<2x2xf32>,
    return
  }
}

</mosaic_0001>

<llo_original>
// kernel: super_entity_mass_centre_forward.1
$region0: #{super_entity_mass_centre_forward.1}
  #allocation0 [shape = 'u32[]', space=smem, size = 0x4, offset = 0x4, fixed_abs, tag = 'smem constant byte address 0x4 - core index']
  #allocation1 [shape = 'u32[72,128]{1,0:T(1,128)}', space=vmem, size = 0x9000, scoped, tag = 'internal scratch']
  %s0 = inlined_call_operand.vmem [shape: f32[2,256], index: 0, kind: input, shape index: {}]
  %s1 = inlined_call_operand.vmem [shape: f32[257,64], index: 1, kind: input, shape index: {}]
  %s2 = inlined_call_operand.vmem [shape: f32[65,2], index: 2, kind: input, shape index: {}]
  %s3 = inlined_call_operand.hbm [shape: f32[2,2], index: 3, kind: output, shape index: {}]
  %s4 = sld [smem:[#allocation0]]
  $region22: #{super_entity_mass_centre_forward.1} parent=0
    _
  %s6 = ssub.s32 1, %s4
  %s7 = scalar_select 0, %s6, %s4
  $region1: #{super_entity_mass_centre_forward.1} parent=0
    #allocation2 [shape = 'u8[1024]{0}', space=vmem, size = 0x400, scoped, tag = 'output window, operand 0, single buffered']
    #allocation3 [shape = 's32[1]{0}', space=sflag, size = 0x4, scoped, tag = 'scoped memory for super_entity_mass_centre_forward.1']
    %8 = vsyncpa [#allocation3], 0
    // Predicated region
    $region2: #{super_entity_mass_centre_forward.1} parent=1 // pred_check
      _
    $region3: #{super_entity_mass_centre_forward.1} parent=1 // pred_check_branch
      %10 = sbr.rel (0) target = $region5
    $region4: #{super_entity_mass_centre_forward.1} parent=1 // pred_region
      _
    $region5: #{super_entity_mass_centre_forward.1} parent=1 // pred_fallthru
      _
    // Predicated region
    $region6: #{super_entity_mass_centre_forward.1} parent=1 // pred_check
      _
    $region7: #{super_entity_mass_centre_forward.1} parent=1 // pred_check_branch
      %12 = sbr.rel (0) target = $region9
    $region8: #{super_entity_mass_centre_forward.1} parent=1 // pred_region
      _
    $region9: #{super_entity_mass_centre_forward.1} parent=1 // pred_fallthru
      _
    // Predicated region
    $region10: #{super_entity_mass_centre_forward.1} parent=1 // pred_check
      _
    $region11: #{super_entity_mass_centre_forward.1} parent=1 // pred_check_branch
      %14 = sbr.rel (0) target = $region13
    $region12: #{super_entity_mass_centre_forward.1} parent=1 // pred_region
      _
    $region13: #{super_entity_mass_centre_forward.1} parent=1 // pred_fallthru
      _
    %v15 = vld [vmem:[%s0] sm:$0xf]
    %17 = vst [vmem:[#allocation1] ss:$4 sm:$0xff] %v15
    %v18 = vld.sshfl [vmem:[#allocation1] sm:$0xff pattern:$0x73625140]
    %v19 = vld.sshfl [vmem:[#allocation1 + $0x8] sm:$0xff pattern:$0x73625140]
    %vm22 = vcmask 1041408
    %v23 = vsel %vm22, %v18, 0.0
    %v24 = vrot.slane %v23, 4
    %v25 = vadd.f32 %v23, %v24
    %v26 = vrot.slane %v25, 2
    %v27 = vadd.f32 %v25, %v26
    %v28 = vrot.slane %v27, 1
    %v29 = vadd.f32 %v27, %v28
    %v30 = vsel %vm22, %v19, 0.0
    %v31 = vrot.slane %v30, 4
    %v32 = vadd.f32 %v30, %v31
    %v33 = vrot.slane %v32, 2
    %v34 = vadd.f32 %v32, %v33
    %v35 = vrot.slane %v34, 1
    %v36 = vadd.f32 %v34, %v35
    %v37 = vrcp.pop 2.0
    %v38 = vmul.f32 2.0, %v37
    %v39 = vsub.f32 1.0, %v38
    %v40 = vmul.f32 %v37, %v39
    %v41 = vadd.f32 %v37, %v40
    %vm42 = vweird.f32 %v37
    %v43 = vsel %vm42, %v37, %v41
    %v44 = vmul.f32 %v29, %v43
    %v45 = vmul.f32 %v36, %v43
    %v48 = vrot.slane %v45, 6
    %v49 = vsel %vm22, %v44, %v48
    %v51 = vsub.f32 %v15, %v49
    %v52 = vmul.f32 %v51, %v51
    %54 = vst [vmem:[#allocation1] ss:$4 sm:$0xff] %v52
    %v55 = vld.sshfl [vmem:[#allocation1] sm:$0xff pattern:$0x73625140]
    %v56 = vld.sshfl [vmem:[#allocation1 + $0x8] sm:$0xff pattern:$0x73625140]
    %v59 = vsel %vm22, %v55, 0.0
    %v60 = vrot.slane %v59, 4
    %v61 = vadd.f32 %v59, %v60
    %v62 = vrot.slane %v61, 2
    %v63 = vadd.f32 %v61, %v62
    %v64 = vrot.slane %v63, 1
    %v65 = vadd.f32 %v63, %v64
    %v66 = vsel %vm22, %v56, 0.0
    %v67 = vrot.slane %v66, 4
    %v68 = vadd.f32 %v66, %v67
    %v69 = vrot.slane %v68, 2
    %v70 = vadd.f32 %v68, %v69
    %v71 = vrot.slane %v70, 1
    %v72 = vadd.f32 %v70, %v71
    %v73 = vmul.f32 %v65, %v43
    %v74 = vmul.f32 %v72, %v43
    %v75 = vadd.f32 %v73, 1e-05
    %v76 = vadd.f32 %v74, 1e-05
    %v77 = vrsqrt.pop %v75
    %v78 = vmul.f32 %v77, %v75
    %v79 = vmul.f32 %v78, %v77
    %v80 = vmul.f32 0.5, %v79
    %v81 = vsub.f32 1.5, %v80
    %v82 = vmul.f32 %v77, %v81
    %vm83 = vweird.f32 %v75
    %vm84 = vweird.f32 %v77
    %vm85 = vmor %vm83, %vm84
    %v86 = vsel %vm85, %v77, %v82
    %v87 = vrsqrt.pop %v76
    %v88 = vmul.f32 %v87, %v76
    %v89 = vmul.f32 %v88, %v87
    %v90 = vmul.f32 0.5, %v89
    %v91 = vsub.f32 1.5, %v90
    %v92 = vmul.f32 %v87, %v91
    %vm93 = vweird.f32 %v76
    %vm94 = vweird.f32 %v87
    %vm95 = vmor %vm93, %vm94
    %v96 = vsel %vm95, %v87, %v92
    %v99 = vrot.slane %v96, 6
    %v100 = vsel %vm22, %v86, %v99
    %v102 = vmul.f32 %v51, %v100
    %v103 = vld [vmem:[%s1] sm:$0xff]
    %v104 = vld [vmem:[%s1 + $0x8] sm:$0xff]
    %v105 = vld [vmem:[%s1 + $0x10] sm:$0xff]
    %v106 = vld [vmem:[%s1 + $0x18] sm:$0xff]
    %v107 = vld [vmem:[%s1 + $0x20] sm:$0xff]
    %v108 = vld [vmem:[%s1 + $0x28] sm:$0xff]
    %v109 = vld [vmem:[%s1 + $0x30] sm:$0xff]
    %v110 = vld [vmem:[%s1 + $0x38] sm:$0xff]
    %v111 = vld [vmem:[%s1 + $0x40] sm:$0xff]
    %v112 = vld [vmem:[%s1 + $0x48] sm:$0xff]
    %v113 = vld [vmem:[%s1 + $0x50] sm:$0xff]
    %v114 = vld [vmem:[%s1 + $0x58] sm:$0xff]
    %v115 = vld [vmem:[%s1 + $0x60] sm:$0xff]
    %v116 = vld [vmem:[%s1 + $0x68] sm:$0xff]
    %v117 = vld [vmem:[%s1 + $0x70] sm:$0xff]
    %v118 = vld [vmem:[%s1 + $0x78] sm:$0xff]
    %v119 = vld [vmem:[%s1 + $0x80] sm:$0xff]
    %v120 = vld [vmem:[%s1 + $0x88] sm:$0xff]
    %v121 = vld [vmem:[%s1 + $0x90] sm:$0xff]
    %v122 = vld [vmem:[%s1 + $0x98] sm:$0xff]
    %v123 = vld [vmem:[%s1 + $0xa0] sm:$0xff]
    %v124 = vld [vmem:[%s1 + $0xa8] sm:$0xff]
    %v125 = vld [vmem:[%s1 + $0xb0] sm:$0xff]
    %v126 = vld [vmem:[%s1 + $0xb8] sm:$0xff]
    %v127 = vld [vmem:[%s1 + $0xc0] sm:$0xff]
    %v128 = vld [vmem:[%s1 + $0xc8] sm:$0xff]
    %v129 = vld [vmem:[%s1 + $0xd0] sm:$0xff]
    %v130 = vld [vmem:[%s1 + $0xd8] sm:$0xff]
    %v131 = vld [vmem:[%s1 + $0xe0] sm:$0xff]
    %v132 = vld [vmem:[%s1 + $0xe8] sm:$0xff]
    %v133 = vld [vmem:[%s1 + $0xf0] sm:$0xff]
    %v134 = vld [vmem:[%s1 + $0xf8] sm:$0xff]
    %v135 = vld [vmem:[%s1 + $0x100] sm:$0x1]
    %v136 = vperm.slane %v135, 0
    %138 = vst [vmem:[#allocation1] ss:$4 sm:$0xff] %v102
    %v139 = vld.sshfl [vmem:[#allocation1] sm:$0xff pattern:$0x73625140]
    %v140 = vld.sshfl [vmem:[#allocation1 + $0x8] sm:$0xff pattern:$0x73625140]
    %143 = vmatpush.msra.mxu0 %v118
    %144 = vmatpush.msra.mxu0 %v117
    %145 = vmatpush.msra.mxu0 %v116
    %146 = vmatpush.msra.mxu0 %v115
    %147 = vmatpush.msra.mxu0 %v114
    %148 = vmatpush.msra.mxu0 %v113
    %149 = vmatpush.msra.mxu0 %v112
    %150 = vmatpush.msra.mxu0 %v111
    %151 = vmatpush.msra.mxu0 %v110
    %152 = vmatpush.msra.mxu0 %v109
    %153 = vmatpush.msra.mxu0 %v108
    %154 = vmatpush.msra.mxu0 %v107
    %155 = vmatpush.msra.mxu0 %v106
    %156 = vmatpush.msra.mxu0 %v105
    %157 = vmatpush.msra.mxu0 %v104
    %158 = vmatpush.msra.mxu0 %v103
    %159 = vmatmul.f32.gmra.mxu0 %v139
    %v160 = vpop.f32.mrf.mxu0
    %v161 = vadd.f32 %v136, %v160
    %162 = vdwg.mxu0
    %163 = vmatpush.msra.mxu0 %v134
    %164 = vmatpush.msra.mxu0 %v133
    %165 = vmatpush.msra.mxu0 %v132
    %166 = vmatpush.msra.mxu0 %v131
    %167 = vmatpush.msra.mxu0 %v130
    %168 = vmatpush.msra.mxu0 %v129
    %169 = vmatpush.msra.mxu0 %v128
    %170 = vmatpush.msra.mxu0 %v127
    %171 = vmatpush.msra.mxu0 %v126
    %172 = vmatpush.msra.mxu0 %v125
    %173 = vmatpush.msra.mxu0 %v124
    %174 = vmatpush.msra.mxu0 %v123
    %175 = vmatpush.msra.mxu0 %v122
    %176 = vmatpush.msra.mxu0 %v121
    %177 = vmatpush.msra.mxu0 %v120
    %178 = vmatpush.msra.mxu0 %v119
    %179 = vmatmul.f32.gmra.mxu0 %v140
    %v180 = vpop.f32.mrf.mxu0
    %v181 = vadd.f32 %v161, %v180
    %182 = vdwg.mxu0
    %vm183 = vcmask 517120
    %v184 = vsel %vm183, %v181, 0.0
    %v185 = vrot.slane %v184, 4
    %v186 = vadd.f32 %v184, %v185
    %v187 = vrot.slane %v186, 2
    %v188 = vadd.f32 %v186, %v187
    %v189 = vrot.slane %v188, 1
    %v190 = vadd.f32 %v188, %v189
    %v191 = vmul.f32 %v190, %v43
    %v192 = vsub.f32 %v181, %v191
    %v193 = vmul.f32 %v192, %v192
    %v194 = vsel %vm183, %v193, 0.0
    %v195 = vrot.slane %v194, 4
    %v196 = vadd.f32 %v194, %v195
    %v197 = vrot.slane %v196, 2
    %v198 = vadd.f32 %v196, %v197
    %v199 = vrot.slane %v198, 1
    %v200 = vadd.f32 %v198, %v199
    %v201 = vmul.f32 %v200, %v43
    %v202 = vadd.f32 %v201, 1e-05
    %v203 = vrsqrt.pop %v202
    %v204 = vmul.f32 %v203, %v202
    %v205 = vmul.f32 %v204, %v203
    %v206 = vmul.f32 0.5, %v205
    %v207 = vsub.f32 1.5, %v206
    %v208 = vmul.f32 %v203, %v207
    %vm209 = vweird.f32 %v202
    %vm210 = vweird.f32 %v203
    %vm211 = vmor %vm209, %vm210
    %v212 = vsel %vm211, %v203, %v208
    %v213 = vmul.f32 %v192, %v212
    %v214 = vld [vmem:[%s2] sm:$0xff]
    %v215 = vld [vmem:[%s2 + $0x8] sm:$0xff]
    %v216 = vld [vmem:[%s2 + $0x10] sm:$0xff]
    %v217 = vld [vmem:[%s2 + $0x18] sm:$0xff]
    %v218 = vld [vmem:[%s2 + $0x20] sm:$0xff]
    %v219 = vld [vmem:[%s2 + $0x28] sm:$0xff]
    %v220 = vld [vmem:[%s2 + $0x30] sm:$0xff]
    %v221 = vld [vmem:[%s2 + $0x38] sm:$0xff]
    %v222 = vld [vmem:[%s2 + $0x40] sm:$0x1]
    %v223 = vperm.slane %v222, 0
    %vm224 = vcmask 523264
    %v226 = vsel %vm224, %v213, 0
    %228 = vmatpush.msra.mxu0 0.0
    %229 = vmatpush.msra.mxu0 0.0
    %230 = vmatpush.msra.mxu0 0.0
    %231 = vmatpush.msra.mxu0 0.0
    %232 = vmatpush.msra.mxu0 0.0
    %233 = vmatpush.msra.mxu0 0.0
    %234 = vmatpush.msra.mxu0 0.0
    %235 = vmatpush.msra.mxu0 0.0
    %236 = vmatpush.msra.mxu0 %v221
    %237 = vmatpush.msra.mxu0 %v220
    %238 = vmatpush.msra.mxu0 %v219
    %239 = vmatpush.msra.mxu0 %v218
    %240 = vmatpush.msra.mxu0 %v217
    %241 = vmatpush.msra.mxu0 %v216
    %242 = vmatpush.msra.mxu0 %v215
    %243 = vmatpush.msra.mxu0 %v214
    %244 = vmatmul.f32.gmra.mxu0 %v226
    %v245 = vpop.f32.mrf.mxu0
    %v246 = vadd.f32 %v223, %v245
    %247 = vdwg.mxu0
    %vm248 = vcmask 9216
    %249 = vst.msk [vmem:[#allocation2] sm:$0x3] %vm248, %v246
    // Predicated region
    $region14: #{super_entity_mass_centre_forward.1} parent=1 // pred_check
      _
    $region15: #{super_entity_mass_centre_forward.1} parent=1 // pred_check_branch
      %251 = sbr.rel (0) target = $region17
    $region16: #{super_entity_mass_centre_forward.1} parent=1 // pred_region
      %253 = vsyncadd [#allocation3], 0
      %s255 = sshll.u32 [#allocation2], 4
      %s256 = int_to_ptr.vmem [resolvable:$true] %s255
      %s257 = sshll.u32 %s3, 4
      %s258 = int_to_ptr.hbm [resolvable:$true] %s257
      %260 = dma.vmem_to_hbm [thread:$0]  %s256, 32, %s258, [#allocation3]
    $region17: #{super_entity_mass_centre_forward.1} parent=1 // pred_fallthru
      _
    // Predicated region
    $region18: #{super_entity_mass_centre_forward.1} parent=1 // pred_check
      _
    $region19: #{super_entity_mass_centre_forward.1} parent=1 // pred_check_branch
      %262 = sbr.rel (0) target = $region21
    $region20: #{super_entity_mass_centre_forward.1} parent=1 // pred_region
      %264 = dma.done [#allocation3], 32
    $region21: #{super_entity_mass_centre_forward.1} parent=1 // pred_fallthru
      _
    %265 = vsyncpa [#allocation3], 1

</llo_original>
